<compile_context>
chip_gen: v7x
topology: tpu7x:2x2x1
jax: 0.10.0
libtpu: 0.0.40
codegen_flags: <defaults>
</compile_context>

<pallas_src>
import jax
import jax.numpy as jnp
from jax.experimental import pallas as pl
from jax.experimental.pallas import tpu as pltpu


OUT_PAD = 8                  # padded lane width of the final layer (>= out_dim)
MATMUL_DTYPE = jnp.bfloat16  # MXU operand dtype for layers 2/3
OUT_DTYPE = jnp.bfloat16     # HBM output dtype (f32 accumulate inside kernel)
_SPLIT_THRESHOLD = 512       # split batches >= this into >=2 grid steps (v7x)
_ALIGN = 16                  # sublane alignment (bf16-friendly)


def _dqn_kernel(x_ref, c_ref, w2_ref, w3_ref, o_ref):
    """One (TB, in_dim) batch tile -> (TB, OUT_PAD) Q-value tile.

    c_ref layout (f32, (in_dim + 3, 64)):
      rows [0, in_dim)      : w1
      row  in_dim           : b1
      row  in_dim + 1       : b2
      row  in_dim + 2       : b3 (first OUT_PAD lanes real, rest zero)
    """
    x = x_ref[...]                                   # (TB, in_dim) f32
    in_dim = x.shape[1]
    out_pad = o_ref.shape[1]

    # ---- Layer 1 on the VPU: K=in_dim (tiny) contraction as broadcast FMAs.
    h1 = c_ref[in_dim:in_dim + 1, :]                 # (1, 64) bias, broadcasts
    for i in range(in_dim):                          # in_dim is static
        h1 = h1 + x[:, i:i + 1] * c_ref[i:i + 1, :]
    h1 = jnp.maximum(h1, 0.0)                        # (TB, 64) f32

    # ---- Layer 2: MXU bf16 x bf16 -> f32 accumulate; bias + ReLU in f32.
    b2 = c_ref[in_dim + 1:in_dim + 2, :]             # (1, 64)
    h2 = jnp.dot(h1.astype(w2_ref.dtype), w2_ref[...],
                 preferred_element_type=jnp.float32)
    h2 = jnp.maximum(h2 + b2, 0.0)                   # (TB, 64) f32

    # ---- Layer 3: MXU bf16 -> f32 into an OUT_PAD-lane tile, store bf16.
    b3 = c_ref[in_dim + 2:in_dim + 3, :out_pad]      # (1, OUT_PAD)
    out = jnp.dot(h2.astype(w3_ref.dtype), w3_ref[...],
                  preferred_element_type=jnp.float32)
    o_ref[...] = (out + b3).astype(o_ref.dtype)      # (TB, OUT_PAD)


def pack_params(params, matmul_dtype=MATMUL_DTYPE):
    """Pack / pad weights once into MXU- and lane-friendly operands."""
    w1, b1 = params["w1"], params["b1"]              # (in, 64), (1, 64)
    w2, b2 = params["w2"], params["b2"]              # (64, 64), (1, 64)
    w3, b3 = params["w3"], params["b3"]              # (64, out), (1, out)
    hid = w1.shape[1]
    out_dim = w3.shape[1]
    assert out_dim <= OUT_PAD <= hid

    # All small f32 constants in ONE ref: [w1; b1; b2; b3(padded to 64 lanes)].
    b3_row = jnp.zeros((1, hid), jnp.float32).at[:, :out_dim].set(b3)
    consts = jnp.concatenate(
        [w1.astype(jnp.float32), b1.astype(jnp.float32),
         b2.astype(jnp.float32), b3_row], axis=0)    # (in + 3, 64)

    # Final-layer weights zero-padded to OUT_PAD lanes (padding MUST be zero).
    w3p = jnp.zeros((hid, OUT_PAD), jnp.float32).at[:, :out_dim].set(w3)

    return {
        "consts": consts,
        "w2": w2.astype(matmul_dtype),
        "w3": w3p.astype(matmul_dtype),
        "out_dim": out_dim,
    }


def _round_up(n, m):
    return ((n + m - 1) // m) * m


def simple_dqn_forward(x, packed, *, block_b=1024, out_dtype=OUT_DTYPE):
    """x: (B, input_dim) float32. packed: output of pack_params. Returns (B, out_dim)."""
    consts, w2, w3 = packed["consts"], packed["w2"], packed["w3"]
    out_dim = packed["out_dim"]
    B, in_dim = x.shape

    # Batch tiling: large tiles amortize the ~0.35us/step overhead; for large
    # batches cap the tile at ceil(B/2) so there are >=2 grid steps (keeps both
    # v7x TensorCores busy via the "parallel" batch axis).
    b_rounded = max(_ALIGN, _round_up(B, _ALIGN))
    if b_rounded >= _SPLIT_THRESHOLD:
        half = _round_up(pl.cdiv(b_rounded, 2), _ALIGN)
        tb = min(block_b, half)
    else:
        tb = min(block_b, b_rounded)
    nb = pl.cdiv(b_rounded, tb)
    b_pad = nb * tb
    if b_pad != B:
        x = jnp.pad(x, ((0, b_pad - B), (0, 0)))

    # Constant index_maps keep the (~18 KB) weights VMEM-resident across steps.
    const2d = lambda a: pl.BlockSpec(a.shape, lambda i: (0, 0))

    compiler_kwargs = dict(dimension_semantics=("parallel",))
    if tb >= 4096:
        # Headroom above v5e's 16 MiB default scoped-VMEM limit.
        compiler_kwargs["vmem_limit_bytes"] = 64 << 20

    out_padded = pl.pallas_call(
        _dqn_kernel,
        out_shape=jax.ShapeDtypeStruct((b_pad, OUT_PAD), out_dtype),
        grid=(nb,),
        in_specs=[
            pl.BlockSpec((tb, in_dim), lambda i: (i, 0)),   # x: pipelined tiles
            const2d(consts),                                # w1/b1/b2/b3 (f32)
            const2d(w2),                                    # bf16 MXU operand
            const2d(w3),                                    # bf16 MXU operand
        ],
        out_specs=pl.BlockSpec((tb, OUT_PAD), lambda i: (i, 0)),
        compiler_params=pltpu.CompilerParams(**compiler_kwargs),
    )(x, consts, w2, w3)

    # Cheap now that the padded output is only OUT_PAD(=8) bf16 lanes wide.
    # (A greedy-action consumer could fuse argmax over lanes [0, out_dim) here.)
    return out_padded[:B, :out_dim]


def init_params(key, input_dim, output_dim, hidden=64):
    """PyTorch-Linear-style init (uniform +-1/sqrt(fan_in)); weights (in, out)."""
    ks = jax.random.split(key, 6)

    def lin(kw, kb, fan_in, fan_out):
        bound = 1.0 / jnp.sqrt(jnp.float32(fan_in))
        w = jax.random.uniform(kw, (fan_in, fan_out), jnp.float32, -bound, bound)
        b = jax.random.uniform(kb, (1, fan_out), jnp.float32, -bound, bound)
        return w, b

    w1, b1 = lin(ks[0], ks[1], input_dim, hidden)
    w2, b2 = lin(ks[2], ks[3], hidden, hidden)
    w3, b3 = lin(ks[4], ks[5], hidden, output_dim)
    return {"w1": w1, "b1": b1, "w2": w2, "b2": b2, "w3": w3, "b3": b3}


def _reference_forward_f32(x, p):
    h1 = jnp.maximum(x @ p["w1"] + p["b1"], 0.0)
    h2 = jnp.maximum(h1 @ p["w2"] + p["b2"], 0.0)
    return h2 @ p["w3"] + p["b3"]


def _reference_forward_matched(x, p, matmul_dtype=MATMUL_DTYPE):
    """Reference with the same bf16-in / f32-accumulate matmuls as the kernel."""
    h1 = jnp.maximum(x @ p["w1"] + p["b1"], 0.0)
    h2 = jnp.dot(h1.astype(matmul_dtype), p["w2"].astype(matmul_dtype),
                 preferred_element_type=jnp.float32) + p["b2"]
    h2 = jnp.maximum(h2, 0.0)
    return jnp.dot(h2.astype(matmul_dtype), p["w3"].astype(matmul_dtype),
                   preferred_element_type=jnp.float32) + p["b3"]


if __name__ == "__main__":
    # Trading env: observation shape (2,), 3 discrete actions.
    input_dim, output_dim = 2, 3
    batch = 8

    key = jax.random.PRNGKey(0)
    k_params, k_x, k_x2 = jax.random.split(key, 3)
    params = init_params(k_params, input_dim, output_dim)
    packed = pack_params(params)

    # --- small batch (per-env inference) ---
    x = jax.random.uniform(k_x, (batch, input_dim), jnp.float32)
    out = jax.block_until_ready(simple_dqn_forward(x, packed))
    assert out.shape == (batch, output_dim)
    out_f32 = out.astype(jnp.float32)
    assert jnp.allclose(out_f32, _reference_forward_matched(x, params),
                        atol=1e-2, rtol=1e-2)
    assert jnp.allclose(out_f32, _reference_forward_f32(x, params),
                        atol=5e-2, rtol=5e-2)

    # --- larger batch exercising the batch grid / padding / parallel axis ---
    x2 = jax.random.uniform(k_x2, (1000, input_dim), jnp.float32)
    out2 = jax.block_until_ready(simple_dqn_forward(x2, packed, block_b=256))
    assert out2.shape == (1000, output_dim)
    assert jnp.allclose(out2.astype(jnp.float32),
                        _reference_forward_matched(x2, params),
                        atol=1e-2, rtol=1e-2)

    print("KERNEL_OK")
</pallas_src>

<mosaic_0001>
module attributes {stable_mosaic.version = 11 : i64} {
  func.func @_dqn_kernel(%arg0: i32, %arg1: memref<16x2xf32, #tpu.memory_space<vmem>>, %arg2: memref<5x64xf32, #tpu.memory_space<vmem>>, %arg3: memref<64x64xbf16, #tpu.memory_space<vmem>>, %arg4: memref<64x8xbf16, #tpu.memory_space<vmem>>, %arg5: memref<16x8xbf16, #tpu.memory_space<vmem>>) attributes {dimension_semantics = [#tpu.dimension_semantics<parallel>], iteration_bounds = array<i64: 1>, scalar_prefetch = 0 : i64, scratch_operands = 0 : i64, tpu.core_type = #tpu.core_type<tc>, window_params = [{transform_indices = @transform_0, window_bounds = array<i64: 16, 2>}, {pipeline_mode = #tpu.pipeline_mode<synchronous>, transform_indices = @transform_1, window_bounds = array<i64: 5, 64>}, {pipeline_mode = #tpu.pipeline_mode<synchronous>, transform_indices = @transform_2, window_bounds = array<i64: 64, 64>}, {pipeline_mode = #tpu.pipeline_mode<synchronous>, transform_indices = @transform_3, window_bounds = array<i64: 64, 8>}, {transform_indices = @transform_4, window_bounds = array<i64: 16, 8>}]} {
    %c0 = arith.constant 0 : index
    %c0_0 = arith.constant 0 : index
    %0 = vector.load %arg1[%c0, %c0_0] : memref<16x2xf32, #tpu.memory_space<vmem>>, vector<16x2xf32>
    %c2 = arith.constant 2 : index
    %c0_1 = arith.constant 0 : index
    %1 = vector.load %arg2[%c2, %c0_1] : memref<5x64xf32, #tpu.memory_space<vmem>>, vector<1x64xf32>
    %2 = vector.extract_strided_slice %0 {offsets = [0, 0], sizes = [16, 1], strides = [1, 1]} : vector<16x2xf32> to vector<16x1xf32>
    %c0_2 = arith.constant 0 : index
    %c0_3 = arith.constant 0 : index
    %3 = vector.load %arg2[%c0_2, %c0_3] : memref<5x64xf32, #tpu.memory_space<vmem>>, vector<1x64xf32>
    %4 = vector.broadcast %2 : vector<16x1xf32> to vector<16x64xf32>
    %5 = vector.broadcast %3 : vector<1x64xf32> to vector<16x64xf32>
    %6 = arith.mulf %4, %5 : vector<16x64xf32>
    %7 = vector.broadcast %1 : vector<1x64xf32> to vector<16x64xf32>
    %8 = arith.addf %7, %6 : vector<16x64xf32>
    %9 = vector.extract_strided_slice %0 {offsets = [0, 1], sizes = [16, 1], strides = [1, 1]} : vector<16x2xf32> to vector<16x1xf32>
    %c1 = arith.constant 1 : index
    %c0_4 = arith.constant 0 : index
    %10 = vector.load %arg2[%c1, %c0_4] : memref<5x64xf32, #tpu.memory_space<vmem>>, vector<1x64xf32>
    %11 = vector.broadcast %9 : vector<16x1xf32> to vector<16x64xf32>
    %12 = vector.broadcast %10 : vector<1x64xf32> to vector<16x64xf32>
    %13 = arith.mulf %11, %12 : vector<16x64xf32>
    %14 = arith.addf %8, %13 : vector<16x64xf32>
    %cst = arith.constant 0.000000e+00 : f32
    %15 = vector.broadcast %cst : f32 to vector<16x64xf32>
    %16 = arith.maximumf %14, %15 : vector<16x64xf32>
    %c3 = arith.constant 3 : index
    %c0_5 = arith.constant 0 : index
    %17 = vector.load %arg2[%c3, %c0_5] : memref<5x64xf32, #tpu.memory_space<vmem>>, vector<1x64xf32>
    %18 = arith.truncf %16 : vector<16x64xf32> to vector<16x64xbf16>
    %c0_6 = arith.constant 0 : index
    %c0_7 = arith.constant 0 : index
    %19 = vector.load %arg3[%c0_6, %c0_7] : memref<64x64xbf16, #tpu.memory_space<vmem>>, vector<64x64xbf16>
    %cst_8 = arith.constant dense<0.000000e+00> : vector<16x64xf32>
    %20 = tpu.matmul %18, %19, %cst_8 {dimension_numbers = #tpu.dot_dimension_numbers<[1], [0], [0], [1], [0, 0, 1, 1], [], []>} : vector<16x64xbf16>, vector<64x64xbf16>, vector<16x64xf32> -> vector<16x64xf32>
    %21 = vector.broadcast %17 : vector<1x64xf32> to vector<16x64xf32>
    %22 = arith.addf %20, %21 : vector<16x64xf32>
    %cst_9 = arith.constant 0.000000e+00 : f32
    %23 = vector.broadcast %cst_9 : f32 to vector<16x64xf32>
    %24 = arith.maximumf %22, %23 : vector<16x64xf32>
    %c4 = arith.constant 4 : index
    %c0_10 = arith.constant 0 : index
    %25 = vector.load %arg2[%c4, %c0_10] : memref<5x64xf32, #tpu.memory_space<vmem>>, vector<1x8xf32>
    %26 = arith.truncf %24 : vector<16x64xf32> to vector<16x64xbf16>
    %c0_11 = arith.constant 0 : index
    %c0_12 = arith.constant 0 : index
    %27 = vector.load %arg4[%c0_11, %c0_12] : memref<64x8xbf16, #tpu.memory_space<vmem>>, vector<64x8xbf16>
    %cst_13 = arith.constant dense<0.000000e+00> : vector<16x8xf32>
    %28 = tpu.matmul %26, %27, %cst_13 {dimension_numbers = #tpu.dot_dimension_numbers<[1], [0], [0], [1], [0, 0, 1, 1], [], []>} : vector<16x64xbf16>, vector<64x8xbf16>, vector<16x8xf32> -> vector<16x8xf32>
    %29 = vector.broadcast %25 : vector<1x8xf32> to vector<16x8xf32>
    %30 = arith.addf %28, %29 : vector<16x8xf32>
    %31 = arith.truncf %30 : vector<16x8xf32> to vector<16x8xbf16>
    %c0_14 = arith.constant 0 : index
    %c0_15 = arith.constant 0 : index
    %32 = vector.load %arg5[%c0_14, %c0_15] : memref<16x8xbf16, #tpu.memory_space<vmem>>, vector<16x8xbf16>
    tpu.vector_store %arg5[%c0_14, %c0_15], %31 {strides = array<i32>} : memref<16x8xbf16, #tpu.memory_space<vmem>>, vector<16x8xbf16>,
    return
  }
  func.func @transform_0(%arg0: i32) -> (i32, i32) {
    %c0_i32 = arith.constant 0 : i32
    %c0_i32_0 = arith.constant 0 : i32
    return %arg0, %c0_i32 : i32, i32
  }
  func.func @transform_1(%arg0: i32) -> (i32, i32) {
    %c0_i32 = arith.constant 0 : i32
    %c0_i32_0 = arith.constant 0 : i32
    %c0_i32_1 = arith.constant 0 : i32
    return %c0_i32, %c0_i32_0 : i32, i32
  }
  func.func @transform_2(%arg0: i32) -> (i32, i32) {
    %c0_i32 = arith.constant 0 : i32
    %c0_i32_0 = arith.constant 0 : i32
    %c0_i32_1 = arith.constant 0 : i32
    return %c0_i32, %c0_i32_0 : i32, i32
  }
  func.func @transform_3(%arg0: i32) -> (i32, i32) {
    %c0_i32 = arith.constant 0 : i32
    %c0_i32_0 = arith.constant 0 : i32
    %c0_i32_1 = arith.constant 0 : i32
    return %c0_i32, %c0_i32_0 : i32, i32
  }
  func.func @transform_4(%arg0: i32) -> (i32, i32) {
    %c0_i32 = arith.constant 0 : i32
    %c0_i32_0 = arith.constant 0 : i32
    return %arg0, %c0_i32 : i32, i32
  }
}

</mosaic_0001>

<llo_original>
// kernel: tpu_custom_call.1
$region0: #{tpu_custom_call.1}
  #allocation0 [shape = 'u32[]', space=smem, size = 0x4, offset = 0x4, fixed_abs, tag = 'smem constant byte address 0x4 - core index']
  #allocation1 [shape = 'u32[144,128]{1,0:T(1,128)}', space=vmem, size = 0x12000, scoped, tag = 'internal scratch']
  %s0 = inlined_call_operand.vmem [shape: f32[16,2], index: 0, kind: input, shape index: {}]
  %s1 = inlined_call_operand.vmem [shape: f32[5,64], index: 1, kind: input, shape index: {}]
  %s2 = inlined_call_operand.vmem [shape: bf16[64,64], index: 2, kind: input, shape index: {}]
  %s3 = inlined_call_operand.vmem [shape: bf16[64,8], index: 3, kind: input, shape index: {}]
  %s4 = inlined_call_operand.vmem [shape: bf16[16,8], index: 4, kind: output, shape index: {}]
  %s5 = sld [smem:[#allocation0]]
  $region26: #{tpu_custom_call.1} parent=0
    _
  %s7 = ssub.s32 1, %s5
  %s8 = scalar_select 0, %s7, %s5
  // Predicated region
  $region2: #{tpu_custom_call.1} parent=0 // pred_check
    _
  $region3: #{tpu_custom_call.1} parent=0 // pred_check_branch
    %10 = sbr.rel (0) target = $region5
  $region4: #{tpu_custom_call.1} parent=0 // pred_region
    _
  $region5: #{tpu_custom_call.1} parent=0 // pred_fallthru
    _
  // Predicated region
  $region6: #{tpu_custom_call.1} parent=0 // pred_check
    _
  $region7: #{tpu_custom_call.1} parent=0 // pred_check_branch
    %12 = sbr.rel (0) target = $region9
  $region8: #{tpu_custom_call.1} parent=0 // pred_region
    _
  $region9: #{tpu_custom_call.1} parent=0 // pred_fallthru
    _
  // Predicated region
  $region10: #{tpu_custom_call.1} parent=0 // pred_check
    _
  $region11: #{tpu_custom_call.1} parent=0 // pred_check_branch
    %14 = sbr.rel (0) target = $region13
  $region12: #{tpu_custom_call.1} parent=0 // pred_region
    _
  $region13: #{tpu_custom_call.1} parent=0 // pred_fallthru
    _
  // Predicated region
  $region14: #{tpu_custom_call.1} parent=0 // pred_check
    _
  $region15: #{tpu_custom_call.1} parent=0 // pred_check_branch
    %16 = sbr.rel (0) target = $region17
  $region16: #{tpu_custom_call.1} parent=0 // pred_region
    _
  $region17: #{tpu_custom_call.1} parent=0 // pred_fallthru
    _
  %v18 = vld [vmem:[%s0] sm:$0xff]
  %v19 = vld [vmem:[%s0 + $0x8] sm:$0xff]
  %v20 = vld [vmem:[%s1 + $0x2] sm:$0x1]
  %v21 = vld [vmem:[%s1] sm:$0x1]
  %23 = vset.pattern.permute.xlu0 0
  %24 = vperm.xlu0 %23, %v18
  %v25 = vpop.permute.xlu0 %24
  %28 = vset.pattern.permute.xlu0 0
  %29 = vperm.xlu0 %28, %v19
  %v30 = vpop.permute.xlu0 %29
  %v32 = vlaneseq
  %v33 = vshrl.u32 %v32, 7
  %v34 = vsub.s32 0, %v33
  %v35 = vrot.slane %v21, %v34
  %v36 = vmul.f32 %v25, %v35
  %v37 = vmul.f32 %v30, %v35
  %v38 = vlaneseq
  %v39 = vshrl.u32 %v38, 7
  %v40 = vsub.s32 0, %v39
  %v41 = vrot.slane %v20, %v40
  %v42 = vadd.f32 %v41, %v36
  %v43 = vadd.f32 %v41, %v37
  %v44 = vld [vmem:[%s1 + $0x1] sm:$0x1]
  %45 = vset.pattern.permute.xlu0 1
  %46 = vperm.xlu0 %45, %v18
  %v47 = vpop.permute.xlu0 %46
  %49 = vset.pattern.permute.xlu0 1
  %50 = vperm.xlu0 %49, %v19
  %v51 = vpop.permute.xlu0 %50
  %v53 = vlaneseq
  %v54 = vshrl.u32 %v53, 7
  %v55 = vsub.s32 0, %v54
  %v56 = vrot.slane %v44, %v55
  %v57 = vmul.f32 %v47, %v56
  %v58 = vmul.f32 %v51, %v56
  %v59 = vadd.f32 %v42, %v57
  %v60 = vadd.f32 %v43, %v58
  %v61 = vmax.f32 %v59, 0.0
  %v62 = vmax.f32 %v60, 0.0
  %v63 = vld [vmem:[%s1 + $0x3] sm:$0x1]
  %v64 = vpack.c.bf16 %v62, %v61
  %v65 = vld [vmem:[%s2] sm:$0xf]
  %v66 = vld [vmem:[%s2 + $0x4] sm:$0xf]
  %v67 = vld [vmem:[%s2 + $0x8] sm:$0xf]
  %v68 = vld [vmem:[%s2 + $0xc] sm:$0xf]
  %v69 = vld [vmem:[%s2 + $0x10] sm:$0xf]
  %v70 = vld [vmem:[%s2 + $0x14] sm:$0xf]
  %v71 = vld [vmem:[%s2 + $0x18] sm:$0xf]
  %v72 = vld [vmem:[%s2 + $0x1c] sm:$0xf]
  %v73 = vlaneseq
  %v74 = vshrl.u32 %v73, 7
  %v75 = vsub.s32 0, %v74
  %v76 = vrot.slane %v63, %v75
  %v85 = vunpack.c.l.b16 %v65
  %v86 = vunpack.c.l.b16 %v66
  %v87 = vunpack.c.l.b16 %v67
  %v88 = vunpack.c.l.b16 %v68
  %v89 = vunpack.c.l.b16 %v69
  %v90 = vunpack.c.l.b16 %v70
  %v91 = vunpack.c.l.b16 %v71
  %v92 = vunpack.c.l.b16 %v72
  %v93 = vpack.c.b16 %v86, %v85
  %v94 = vpack.c.b16 %v88, %v87
  %v95 = vpack.c.b16 %v90, %v89
  %v96 = vpack.c.b16 %v92, %v91
  %vm101 = vcmask 523264
  %v103 = vsel %vm101, %v64, 0
  %105 = vmatprep.subr.bf16.mxu0 0
  %106 = vmatpush1.bf16.msra.mxu0 %v93
  %107 = vmatprep.subr.bf16.mxu0 0
  %108 = vmatpush1.bf16.msra.mxu0 %v94
  %109 = vmatprep.subr.bf16.mxu0 0
  %110 = vmatpush1.bf16.msra.mxu0 %v95
  %111 = vmatprep.subr.bf16.mxu0 0
  %112 = vmatpush1.bf16.msra.mxu0 %v96
  %113 = vmatprep.subr.bf16.mxu0 0
  %114 = vmatpush1.bf16.msra.mxu0 0
  %115 = vmatprep.subr.bf16.mxu0 0
  %116 = vmatpush1.bf16.msra.mxu0 0
  %117 = vmatprep.subr.bf16.mxu0 0
  %118 = vmatpush1.bf16.msra.mxu0 0
  %119 = vmatprep.subr.bf16.mxu0 0
  %120 = vmatpush1.bf16.msra.mxu0 0
  %121 = vmatprep.subr.bf16.mxu0 0
  %122 = vmatpush1.bf16.msra.mxu0 0
  %123 = vmatprep.subr.bf16.mxu0 0
  %124 = vmatpush1.bf16.msra.mxu0 0
  %125 = vmatprep.subr.bf16.mxu0 0
  %126 = vmatpush1.bf16.msra.mxu0 0
  %127 = vmatprep.subr.bf16.mxu0 0
  %128 = vmatpush1.bf16.msra.mxu0 0
  %129 = vmatprep.subr.bf16.mxu0 0
  %130 = vmatpush1.bf16.msra.mxu0 0
  %131 = vmatprep.subr.bf16.mxu0 0
  %132 = vmatpush1.bf16.msra.mxu0 0
  %133 = vmatprep.subr.bf16.mxu0 0
  %134 = vmatpush1.bf16.msra.mxu0 0
  %135 = vmatprep.subr.bf16.mxu0 0
  %136 = vmatpush1.bf16.msra.mxu0 0
  %137 = vmatprep.mubr.bf16.mxu0 0
  %138 = vmatmul.mubr.bf16.gmra.mrb[0].mxu0 %v103
  %v139 = vpop.f32.mrb[0].mxu0
  %v140 = vadd.f32 %v76, %v139
  %v141 = vpop.f32.mrb[0].mxu0
  %v142 = vpop.f32.mrb[0].mxu0
  %v143 = vadd.f32 %v76, %v142
  %v144 = vpop.f32.mrb[0].mxu0
  %145 = vdwg.mxu0
  %v146 = vmax.f32 %v140, 0.0
  %v147 = vmax.f32 %v143, 0.0
  %v148 = vld [vmem:[%s1 + $0x4] sm:$0x1]
  %v149 = vpack.c.bf16 %v147, %v146
  %v150 = vld [vmem:[%s3] sm:$0xf]
  %v151 = vld [vmem:[%s3 + $0x4] sm:$0xf]
  %v152 = vld [vmem:[%s3 + $0x8] sm:$0xf]
  %v153 = vld [vmem:[%s3 + $0xc] sm:$0xf]
  %v154 = vld [vmem:[%s3 + $0x10] sm:$0xf]
  %v155 = vld [vmem:[%s3 + $0x14] sm:$0xf]
  %v156 = vld [vmem:[%s3 + $0x18] sm:$0xf]
  %v157 = vld [vmem:[%s3 + $0x1c] sm:$0xf]
  %v158 = vlaneseq
  %v159 = vshrl.u32 %v158, 7
  %v160 = vsub.s32 0, %v159
  %v161 = vrot.slane %v148, %v160
  %v170 = vunpack.c.l.b16 %v150
  %v171 = vunpack.c.l.b16 %v151
  %v172 = vunpack.c.l.b16 %v152
  %v173 = vunpack.c.l.b16 %v153
  %v174 = vunpack.c.l.b16 %v154
  %v175 = vunpack.c.l.b16 %v155
  %v176 = vunpack.c.l.b16 %v156
  %v177 = vunpack.c.l.b16 %v157
  %v178 = vpack.c.b16 %v171, %v170
  %v179 = vpack.c.b16 %v173, %v172
  %v180 = vpack.c.b16 %v175, %v174
  %v181 = vpack.c.b16 %v177, %v176
  %v187 = vsel %vm101, %v149, 0
  %189 = vmatprep.subr.bf16.mxu0 0
  %190 = vmatpush1.bf16.msra.mxu0 %v178
  %191 = vmatprep.subr.bf16.mxu0 0
  %192 = vmatpush1.bf16.msra.mxu0 %v179
  %193 = vmatprep.subr.bf16.mxu0 0
  %194 = vmatpush1.bf16.msra.mxu0 %v180
  %195 = vmatprep.subr.bf16.mxu0 0
  %196 = vmatpush1.bf16.msra.mxu0 %v181
  %197 = vmatprep.subr.bf16.mxu0 0
  %198 = vmatpush1.bf16.msra.mxu0 0
  %199 = vmatprep.subr.bf16.mxu0 0
  %200 = vmatpush1.bf16.msra.mxu0 0
  %201 = vmatprep.subr.bf16.mxu0 0
  %202 = vmatpush1.bf16.msra.mxu0 0
  %203 = vmatprep.subr.bf16.mxu0 0
  %204 = vmatpush1.bf16.msra.mxu0 0
  %205 = vmatprep.subr.bf16.mxu0 0
  %206 = vmatpush1.bf16.msra.mxu0 0
  %207 = vmatprep.subr.bf16.mxu0 0
  %208 = vmatpush1.bf16.msra.mxu0 0
  %209 = vmatprep.subr.bf16.mxu0 0
  %210 = vmatpush1.bf16.msra.mxu0 0
  %211 = vmatprep.subr.bf16.mxu0 0
  %212 = vmatpush1.bf16.msra.mxu0 0
  %213 = vmatprep.subr.bf16.mxu0 0
  %214 = vmatpush1.bf16.msra.mxu0 0
  %215 = vmatprep.subr.bf16.mxu0 0
  %216 = vmatpush1.bf16.msra.mxu0 0
  %217 = vmatprep.subr.bf16.mxu0 0
  %218 = vmatpush1.bf16.msra.mxu0 0
  %219 = vmatprep.subr.bf16.mxu0 0
  %220 = vmatpush1.bf16.msra.mxu0 0
  %221 = vmatprep.mubr.bf16.mxu0 0
  %222 = vmatmul.mubr.bf16.gmra.mrb[0].mxu0 %v187
  %v223 = vpop.f32.mrb[0].mxu0
  %v224 = vadd.f32 %v161, %v223
  %v225 = vpop.f32.mrb[0].mxu0
  %v226 = vpop.f32.mrb[0].mxu0
  %v227 = vadd.f32 %v161, %v226
  %v228 = vpop.f32.mrb[0].mxu0
  %229 = vdwg.mxu0
  %v230 = vpack.c.bf16 %v227, %v224
  %v232 = vunpack.c.l.b16 %v230
  %v233 = vunpack.c.h.b16 %v230
  %v234 = vpack.c.b16 %v232, %v232
  %v235 = vpack.c.b16 %v233, %v233
  %vm238 = vcmask 60416
  %239 = vst.msk [vmem:[%s4] sm:$0xf] %vm238, %v234
  %240 = vst.msk [vmem:[%s4 + $0x4] sm:$0xf] %vm238, %v235
  // Predicated region
  $region18: #{tpu_custom_call.1} parent=0 // pred_check
    _
  $region19: #{tpu_custom_call.1} parent=0 // pred_check_branch
    %242 = sbr.rel (0) target = $region21
  $region20: #{tpu_custom_call.1} parent=0 // pred_region
    _
  $region21: #{tpu_custom_call.1} parent=0 // pred_fallthru
    _
  // Predicated region
  $region22: #{tpu_custom_call.1} parent=0 // pred_check
    _
  $region23: #{tpu_custom_call.1} parent=0 // pred_check_branch
    %244 = sbr.rel (0) target = $region25
  $region24: #{tpu_custom_call.1} parent=0 // pred_region
    _
  $region25: #{tpu_custom_call.1} parent=0 // pred_fallthru
    _

</llo_original>
